<compile_context>
chip_gen: v5e
topology: v5e:2x2
jax: 0.10.0
libtpu: 0.0.40
codegen_flags: <defaults>
</compile_context>

<pallas_src>
import jax
import jax.numpy as jnp
from jax.experimental import pallas as pl
from jax.experimental.pallas import tpu as pltpu

STATE_SIZE = 42      # 6x7 ConnectX board
ACTION_SIZE = 7      # one action per column
EPS = 1e-5           # nn.BatchNorm1d default eps


def policy_kernel(bn_ref,                      # (6, 2) SMEM: rows [g1,be1,g2,be2,g3,be3], cols = channel
                  x_ref,                       # (B, 84) lane-stacked channels [ch0(42) | ch1(42)]
                  w1_ref, b1_ref,              # (84, 160), (1, 160)   block-diagonal
                  w2_ref, b2_ref,              # (160, 320), (1, 320)  block-diagonal
                  w3_ref, b3_ref,              # (320, 84), (1, 84)    block-diagonal
                  wa_ref, ba_ref,              # (84, 14), (1, 14)     block-diagonal
                  wh_ref, bh_ref,              # (14, 7), (1, 7)       head
                  out_ref):                    # (B, 7)
    f32 = jnp.float32

    def linear(x, w_ref, b_ref):
        w = w_ref[...]
        # bf16 (or f32) MXU inputs, f32 accumulate; bias add in f32.
        return jnp.dot(x.astype(w.dtype), w, preferred_element_type=f32) + b_ref[...]

    def bn_maybe_relu(h, layer, relu=True):
        # PyTorch training-mode BatchNorm1d(2) on a lane-stacked (B, 2*feat)
        # activation: columns [:feat] = channel 0, [feat:] = channel 1.
        # Per-channel stats over (batch, feat), biased variance, affine.
        b, two_feat = h.shape
        feat = two_feat // 2
        inv_n = 1.0 / float(b * feat)                          # compile-time constant
        cols = jax.lax.broadcasted_iota(jnp.int32, (1, two_feat), 1)
        is_ch1 = cols >= feat                                  # (1, 2*feat) channel selector
        cm0 = (cols < feat).astype(f32)                        # channel-0 lane mask
        h2 = h * h
        # Lane-first reductions; channel-1 sums fall out by subtraction.
        rs_all = jnp.sum(h,        axis=-1, keepdims=True)     # (B, 1)
        rs_c0  = jnp.sum(h * cm0,  axis=-1, keepdims=True)
        rq_all = jnp.sum(h2,       axis=-1, keepdims=True)
        rq_c0  = jnp.sum(h2 * cm0, axis=-1, keepdims=True)
        s0 = jnp.sum(rs_c0)
        s1 = jnp.sum(rs_all - rs_c0)
        q0 = jnp.sum(rq_c0)
        q1 = jnp.sum(rq_all - rq_c0)
        m0 = s0 * inv_n
        m1 = s1 * inv_n
        v0 = jnp.maximum(q0 * inv_n - m0 * m0, 0.0)
        v1 = jnp.maximum(q1 * inv_n - m1 * m1, 0.0)
        g0 = bn_ref[2 * layer, 0]
        g1 = bn_ref[2 * layer, 1]
        be0 = bn_ref[2 * layer + 1, 0]
        be1 = bn_ref[2 * layer + 1, 1]
        sc0 = g0 * jax.lax.rsqrt(v0 + EPS)
        sc1 = g1 * jax.lax.rsqrt(v1 + EPS)
        sh0 = be0 - m0 * sc0
        sh1 = be1 - m1 * sc1
        scale = jnp.where(is_ch1, sc1, sc0)                    # (1, 2*feat)
        shift = jnp.where(is_ch1, sh1, sh0)
        y = h * scale + shift
        return jnp.maximum(y, 0.0) if relu else y

    x = x_ref[...].astype(f32)

    # fc1 -> bn1 -> relu ; fc2 -> bn2 -> relu ; fc3 -> bn3 (no relu)
    h = bn_maybe_relu(linear(x, w1_ref, b1_ref), 0)
    h = bn_maybe_relu(linear(h, w2_ref, b2_ref), 1)
    h = bn_maybe_relu(linear(h, w3_ref, b3_ref), 2, relu=False)

    # linear_activation -> relu.  The lane layout (B, 14) = [ch0 | ch1] already
    # equals PyTorch's view(-1, 2*action_size), so the head is one matmul.
    a = jnp.maximum(linear(h, wa_ref, ba_ref), 0.0)            # (B, 14)
    z = linear(a, wh_ref, bh_ref)                              # (B, 7)

    # softmax over the action dimension — exact divide (see header).
    z = z - jnp.max(z, axis=-1, keepdims=True)
    e = jnp.exp(z)
    out_ref[...] = e / jnp.sum(e, axis=-1, keepdims=True)


def _block_diag_T(w):
    """PyTorch (out, in) weight -> lane-stacked block-diagonal (2*in, 2*out)."""
    wt = w.T                                                   # (in, out)
    i, o = wt.shape
    z = jnp.zeros((i, o), wt.dtype)
    return jnp.concatenate(
        [jnp.concatenate([wt, z], axis=1),
         jnp.concatenate([z, wt], axis=1)], axis=0)


def init_params(key):
    ks = jax.random.split(key, 12)

    def w(k, shape, scale=0.1):
        return (scale * jax.random.normal(k, shape)).astype(jnp.float32)

    return dict(
        w1=w(ks[0], (80, STATE_SIZE)),      b1=w(ks[1], (80,)),
        w2=w(ks[2], (160, 80)),             b2=w(ks[3], (160,)),
        w3=w(ks[4], (42, 160)),             b3=w(ks[5], (42,)),
        wa=w(ks[6], (ACTION_SIZE, 42)),     ba=w(ks[7], (ACTION_SIZE,)),
        wh=w(ks[8], (ACTION_SIZE, 2 * ACTION_SIZE)), bh=w(ks[9], (ACTION_SIZE,)),
        # BatchNorm affine params (nontrivial but deterministic)
        g1=1.0 + w(ks[10], (2,)), be1=w(ks[11], (2,)),
        g2=jnp.asarray([0.9, 1.1], jnp.float32), be2=jnp.asarray([0.05, -0.05], jnp.float32),
        g3=jnp.asarray([1.05, 0.95], jnp.float32), be3=jnp.asarray([-0.02, 0.02], jnp.float32),
    )


def policy_forward(x, p, compute_dtype=jnp.bfloat16):
    """x: (B, 2, STATE_SIZE) float32 -> (B, ACTION_SIZE) softmax probs.

    compute_dtype: dtype for matmul inputs.  bf16 is native on every TPU MXU
    (v5e/v6e/v7x) and halves weight/activation bytes; accumulation, BN stats,
    rsqrt and softmax are always f32.  Pass jnp.float32 for strict checks.
    """
    B = x.shape[0]
    # Contiguous reshape only — no transpose, no pad, no extra HBM round trip.
    xs = x.reshape(B, 2 * STATE_SIZE).astype(jnp.float32)      # (B, 84)

    bn = jnp.stack([p["g1"], p["be1"], p["g2"], p["be2"], p["g3"], p["be3"]],
                   axis=0).astype(jnp.float32)                 # (6, 2) -> SMEM

    cd = compute_dtype
    dup = lambda b: jnp.concatenate([b, b]).reshape(1, -1).astype(jnp.float32)
    args = (
        bn,
        xs,
        _block_diag_T(p["w1"]).astype(cd), dup(p["b1"]),
        _block_diag_T(p["w2"]).astype(cd), dup(p["b2"]),
        _block_diag_T(p["w3"]).astype(cd), dup(p["b3"]),
        _block_diag_T(p["wa"]).astype(cd), dup(p["ba"]),
        p["wh"].T.astype(cd), p["bh"].reshape(1, -1).astype(jnp.float32),
    )

    vmem = pl.BlockSpec(memory_space=pltpu.MemorySpace.VMEM)
    smem = pl.BlockSpec(memory_space=pltpu.MemorySpace.SMEM)
    in_specs = [smem] + [vmem] * (len(args) - 1)

    return pl.pallas_call(
        policy_kernel,
        out_shape=jax.ShapeDtypeStruct((B, ACTION_SIZE), jnp.float32),
        in_specs=in_specs,
        out_specs=vmem,
        # 32 MiB fits v7x's 64 MiB physical VMEM as well as v5e/v6e; the whole
        # resident set here is < 1 MiB.
        compiler_params=pltpu.CompilerParams(vmem_limit_bytes=32 * 1024 * 1024),
    )(*args)


def ref_forward(x, p):
    """Pure-JAX mirror of the PyTorch forward (training-mode BN)."""
    def bn(h, g, b):
        m = jnp.mean(h, axis=(0, 2), keepdims=True)
        v = jnp.mean((h - m) ** 2, axis=(0, 2), keepdims=True)
        return (h - m) / jnp.sqrt(v + EPS) * g[None, :, None] + b[None, :, None]
    h = x @ p["w1"].T + p["b1"]
    h = jax.nn.relu(bn(h, p["g1"], p["be1"]))
    h = h @ p["w2"].T + p["b2"]
    h = jax.nn.relu(bn(h, p["g2"], p["be2"]))
    h = h @ p["w3"].T + p["b3"]
    h = bn(h, p["g3"], p["be3"])
    h = jax.nn.relu(h @ p["wa"].T + p["ba"])
    z = h.reshape(x.shape[0], 2 * ACTION_SIZE) @ p["wh"].T + p["bh"]
    return jax.nn.softmax(z, axis=-1)


if __name__ == "__main__":
    key = jax.random.PRNGKey(0)
    kx, kp = jax.random.split(key)
    params = init_params(kp)

    # Small shape consistent with the module: (B, 2 channels, 42-cell board).
    B = 2
    x = jax.random.normal(kx, (B, 2, STATE_SIZE), dtype=jnp.float32)
    ref = ref_forward(x, params)

    # f32 path (strict accuracy).
    out_f32 = jax.block_until_ready(policy_forward(x, params, compute_dtype=jnp.float32))
    assert out_f32.shape == (B, ACTION_SIZE)
    assert bool(jnp.all(jnp.isfinite(out_f32)))
    assert bool(jnp.allclose(jnp.sum(out_f32, axis=-1), 1.0, atol=1e-5))
    assert bool(jnp.allclose(out_f32, ref, rtol=2e-3, atol=5e-4)), (out_f32, ref)

    # bf16-matmul path (recommended on v5e/v6e/v7x; f32 accumulation).
    out_bf16 = jax.block_until_ready(policy_forward(x, params, compute_dtype=jnp.bfloat16))
    assert out_bf16.shape == (B, ACTION_SIZE)
    assert bool(jnp.all(jnp.isfinite(out_bf16)))
    assert bool(jnp.allclose(out_bf16, ref, rtol=0.0, atol=5e-2)), (out_bf16, ref)

    # Non-multiple-of-8 batch: unaligned sublane count, no padding / masks needed.
    B2 = 13
    x2 = jax.random.normal(jax.random.PRNGKey(3), (B2, 2, STATE_SIZE), dtype=jnp.float32)
    ref2 = ref_forward(x2, params)
    out2 = jax.block_until_ready(policy_forward(x2, params, compute_dtype=jnp.float32))
    assert out2.shape == (B2, ACTION_SIZE)
    assert bool(jnp.all(jnp.isfinite(out2)))
    assert bool(jnp.allclose(out2, ref2, rtol=2e-3, atol=5e-4)), (out2, ref2)

    print("KERNEL_OK")
</pallas_src>

<mosaic_0001>
module attributes {stable_mosaic.version = 11 : i64} {
  func.func @policy_kernel(%arg0: memref<6x2xf32, #tpu.memory_space<smem>>, %arg1: memref<2x84xf32, #tpu.memory_space<vmem>>, %arg2: memref<84x160xf32, #tpu.memory_space<vmem>>, %arg3: memref<1x160xf32, #tpu.memory_space<vmem>>, %arg4: memref<160x320xf32, #tpu.memory_space<vmem>>, %arg5: memref<1x320xf32, #tpu.memory_space<vmem>>, %arg6: memref<320x84xf32, #tpu.memory_space<vmem>>, %arg7: memref<1x84xf32, #tpu.memory_space<vmem>>, %arg8: memref<84x14xf32, #tpu.memory_space<vmem>>, %arg9: memref<1x14xf32, #tpu.memory_space<vmem>>, %arg10: memref<14x7xf32, #tpu.memory_space<vmem>>, %arg11: memref<1x7xf32, #tpu.memory_space<vmem>>, %arg12: memref<2x7xf32, #tpu.memory_space<vmem>>) attributes {dimension_semantics = [], scalar_prefetch = 0 : i64, scratch_operands = 0 : i64, tpu.core_type = #tpu.core_type<tc>} {
    %c0 = arith.constant 0 : index
    %c0_0 = arith.constant 0 : index
    %0 = vector.load %arg1[%c0, %c0_0] : memref<2x84xf32, #tpu.memory_space<vmem>>, vector<2x84xf32>
    %c0_1 = arith.constant 0 : index
    %c0_2 = arith.constant 0 : index
    %1 = vector.load %arg2[%c0_1, %c0_2] : memref<84x160xf32, #tpu.memory_space<vmem>>, vector<84x160xf32>
    %cst = arith.constant dense<0.000000e+00> : vector<2x160xf32>
    %2 = tpu.matmul %0, %1, %cst {dimension_numbers = #tpu.dot_dimension_numbers<[1], [0], [0], [1], [0, 0, 1, 1], [], []>} : vector<2x84xf32>, vector<84x160xf32>, vector<2x160xf32> -> vector<2x160xf32>
    %c0_3 = arith.constant 0 : index
    %c0_4 = arith.constant 0 : index
    %3 = vector.load %arg3[%c0_3, %c0_4] : memref<1x160xf32, #tpu.memory_space<vmem>>, vector<1x160xf32>
    %4 = vector.broadcast %3 : vector<1x160xf32> to vector<2x160xf32>
    %5 = arith.addf %2, %4 : vector<2x160xf32>
    %6 = tpu.iota {dimensions = array<i32: 1>} : vector<1x160xi32>
    %c80_i32 = arith.constant 80 : i32
    %7 = vector.broadcast %c80_i32 : i32 to vector<1x160xi32>
    %8 = arith.cmpi sge, %6, %7 : vector<1x160xi32>
    %c80_i32_5 = arith.constant 80 : i32
    %9 = vector.broadcast %c80_i32_5 : i32 to vector<1x160xi32>
    %10 = arith.cmpi slt, %6, %9 : vector<1x160xi32>
    %11 = arith.extui %10 : vector<1x160xi1> to vector<1x160xi32>
    %12 = arith.sitofp %11 : vector<1x160xi32> to vector<1x160xf32>
    %13 = arith.mulf %5, %5 : vector<2x160xf32>
    %cst_6 = arith.constant dense<0.000000e+00> : vector<2xf32>
    %14 = vector.multi_reduction <add>, %5, %cst_6 [1] : vector<2x160xf32> to vector<2xf32>
    %15 = vector.shape_cast %14 : vector<2xf32> to vector<2x1xf32>
    %16 = vector.broadcast %12 : vector<1x160xf32> to vector<2x160xf32>
    %17 = arith.mulf %5, %16 : vector<2x160xf32>
    %cst_7 = arith.constant dense<0.000000e+00> : vector<2xf32>
    %18 = vector.multi_reduction <add>, %17, %cst_7 [1] : vector<2x160xf32> to vector<2xf32>
    %19 = vector.shape_cast %18 : vector<2xf32> to vector<2x1xf32>
    %cst_8 = arith.constant dense<0.000000e+00> : vector<2xf32>
    %20 = vector.multi_reduction <add>, %13, %cst_8 [1] : vector<2x160xf32> to vector<2xf32>
    %21 = vector.shape_cast %20 : vector<2xf32> to vector<2x1xf32>
    %22 = vector.broadcast %12 : vector<1x160xf32> to vector<2x160xf32>
    %23 = arith.mulf %13, %22 : vector<2x160xf32>
    %cst_9 = arith.constant dense<0.000000e+00> : vector<2xf32>
    %24 = vector.multi_reduction <add>, %23, %cst_9 [1] : vector<2x160xf32> to vector<2xf32>
    %25 = vector.shape_cast %24 : vector<2xf32> to vector<2x1xf32>
    %26 = vector.shape_cast %19 : vector<2x1xf32> to vector<1x2x1xf32>
    %cst_10 = arith.constant dense<0.000000e+00> : vector<1xf32>
    %27 = vector.multi_reduction <add>, %26, %cst_10 [1, 2] : vector<1x2x1xf32> to vector<1xf32>
    %28 = vector.shape_cast %27 : vector<1xf32> to vector<1x1x1xf32>
    %29 = vector.extract %28[0, 0, 0] : f32 from vector<1x1x1xf32>
    %30 = arith.subf %15, %19 : vector<2x1xf32>
    %31 = vector.shape_cast %30 : vector<2x1xf32> to vector<1x2x1xf32>
    %cst_11 = arith.constant dense<0.000000e+00> : vector<1xf32>
    %32 = vector.multi_reduction <add>, %31, %cst_11 [1, 2] : vector<1x2x1xf32> to vector<1xf32>
    %33 = vector.shape_cast %32 : vector<1xf32> to vector<1x1x1xf32>
    %34 = vector.extract %33[0, 0, 0] : f32 from vector<1x1x1xf32>
    %35 = vector.shape_cast %25 : vector<2x1xf32> to vector<1x2x1xf32>
    %cst_12 = arith.constant dense<0.000000e+00> : vector<1xf32>
    %36 = vector.multi_reduction <add>, %35, %cst_12 [1, 2] : vector<1x2x1xf32> to vector<1xf32>
    %37 = vector.shape_cast %36 : vector<1xf32> to vector<1x1x1xf32>
    %38 = vector.extract %37[0, 0, 0] : f32 from vector<1x1x1xf32>
    %39 = arith.subf %21, %25 : vector<2x1xf32>
    %40 = vector.shape_cast %39 : vector<2x1xf32> to vector<1x2x1xf32>
    %cst_13 = arith.constant dense<0.000000e+00> : vector<1xf32>
    %41 = vector.multi_reduction <add>, %40, %cst_13 [1, 2] : vector<1x2x1xf32> to vector<1xf32>
    %42 = vector.shape_cast %41 : vector<1xf32> to vector<1x1x1xf32>
    %43 = vector.extract %42[0, 0, 0] : f32 from vector<1x1x1xf32>
    %cst_14 = arith.constant 6.250000e-03 : f32
    %44 = arith.mulf %29, %cst_14 : f32
    %cst_15 = arith.constant 6.250000e-03 : f32
    %45 = arith.mulf %34, %cst_15 : f32
    %cst_16 = arith.constant 6.250000e-03 : f32
    %46 = arith.mulf %38, %cst_16 : f32
    %47 = arith.mulf %44, %44 : f32
    %48 = arith.subf %46, %47 : f32
    %cst_17 = arith.constant 0.000000e+00 : f32
    %49 = arith.maximumf %48, %cst_17 : f32
    %cst_18 = arith.constant 6.250000e-03 : f32
    %50 = arith.mulf %43, %cst_18 : f32
    %51 = arith.mulf %45, %45 : f32
    %52 = arith.subf %50, %51 : f32
    %cst_19 = arith.constant 0.000000e+00 : f32
    %53 = arith.maximumf %52, %cst_19 : f32
    %c0_20 = arith.constant 0 : index
    %c0_21 = arith.constant 0 : index
    %54 = memref.load %arg0[%c0_20, %c0_21] : memref<6x2xf32, #tpu.memory_space<smem>>
    %c0_22 = arith.constant 0 : index
    %c1 = arith.constant 1 : index
    %55 = memref.load %arg0[%c0_22, %c1] : memref<6x2xf32, #tpu.memory_space<smem>>
    %c1_23 = arith.constant 1 : index
    %c0_24 = arith.constant 0 : index
    %56 = memref.load %arg0[%c1_23, %c0_24] : memref<6x2xf32, #tpu.memory_space<smem>>
    %c1_25 = arith.constant 1 : index
    %c1_26 = arith.constant 1 : index
    %57 = memref.load %arg0[%c1_25, %c1_26] : memref<6x2xf32, #tpu.memory_space<smem>>
    %cst_27 = arith.constant 9.99999974E-6 : f32
    %58 = arith.addf %49, %cst_27 : f32
    %59 = math.rsqrt %58 : f32
    %60 = arith.mulf %54, %59 : f32
    %cst_28 = arith.constant 9.99999974E-6 : f32
    %61 = arith.addf %53, %cst_28 : f32
    %62 = math.rsqrt %61 : f32
    %63 = arith.mulf %55, %62 : f32
    %64 = arith.mulf %44, %60 : f32
    %65 = arith.subf %56, %64 : f32
    %66 = arith.mulf %45, %63 : f32
    %67 = arith.subf %57, %66 : f32
    %68 = vector.broadcast %63 : f32 to vector<1x160xf32>
    %69 = vector.broadcast %60 : f32 to vector<1x160xf32>
    %70 = arith.select %8, %68, %69 : vector<1x160xi1>, vector<1x160xf32>
    %71 = vector.broadcast %67 : f32 to vector<1x160xf32>
    %72 = vector.broadcast %65 : f32 to vector<1x160xf32>
    %73 = arith.select %8, %71, %72 : vector<1x160xi1>, vector<1x160xf32>
    %74 = vector.broadcast %70 : vector<1x160xf32> to vector<2x160xf32>
    %75 = arith.mulf %5, %74 : vector<2x160xf32>
    %76 = vector.broadcast %73 : vector<1x160xf32> to vector<2x160xf32>
    %77 = arith.addf %75, %76 : vector<2x160xf32>
    %cst_29 = arith.constant 0.000000e+00 : f32
    %78 = vector.broadcast %cst_29 : f32 to vector<2x160xf32>
    %79 = arith.maximumf %77, %78 : vector<2x160xf32>
    %c0_30 = arith.constant 0 : index
    %c0_31 = arith.constant 0 : index
    %80 = vector.load %arg4[%c0_30, %c0_31] : memref<160x320xf32, #tpu.memory_space<vmem>>, vector<160x320xf32>
    %cst_32 = arith.constant dense<0.000000e+00> : vector<2x320xf32>
    %81 = tpu.matmul %79, %80, %cst_32 {dimension_numbers = #tpu.dot_dimension_numbers<[1], [0], [0], [1], [0, 0, 1, 1], [], []>} : vector<2x160xf32>, vector<160x320xf32>, vector<2x320xf32> -> vector<2x320xf32>
    %c0_33 = arith.constant 0 : index
    %c0_34 = arith.constant 0 : index
    %82 = vector.load %arg5[%c0_33, %c0_34] : memref<1x320xf32, #tpu.memory_space<vmem>>, vector<1x320xf32>
    %83 = vector.broadcast %82 : vector<1x320xf32> to vector<2x320xf32>
    %84 = arith.addf %81, %83 : vector<2x320xf32>
    %85 = tpu.iota {dimensions = array<i32: 1>} : vector<1x320xi32>
    %c160_i32 = arith.constant 160 : i32
    %86 = vector.broadcast %c160_i32 : i32 to vector<1x320xi32>
    %87 = arith.cmpi sge, %85, %86 : vector<1x320xi32>
    %c160_i32_35 = arith.constant 160 : i32
    %88 = vector.broadcast %c160_i32_35 : i32 to vector<1x320xi32>
    %89 = arith.cmpi slt, %85, %88 : vector<1x320xi32>
    %90 = arith.extui %89 : vector<1x320xi1> to vector<1x320xi32>
    %91 = arith.sitofp %90 : vector<1x320xi32> to vector<1x320xf32>
    %92 = arith.mulf %84, %84 : vector<2x320xf32>
    %cst_36 = arith.constant dense<0.000000e+00> : vector<2xf32>
    %93 = vector.multi_reduction <add>, %84, %cst_36 [1] : vector<2x320xf32> to vector<2xf32>
    %94 = vector.shape_cast %93 : vector<2xf32> to vector<2x1xf32>
    %95 = vector.broadcast %91 : vector<1x320xf32> to vector<2x320xf32>
    %96 = arith.mulf %84, %95 : vector<2x320xf32>
    %cst_37 = arith.constant dense<0.000000e+00> : vector<2xf32>
    %97 = vector.multi_reduction <add>, %96, %cst_37 [1] : vector<2x320xf32> to vector<2xf32>
    %98 = vector.shape_cast %97 : vector<2xf32> to vector<2x1xf32>
    %cst_38 = arith.constant dense<0.000000e+00> : vector<2xf32>
    %99 = vector.multi_reduction <add>, %92, %cst_38 [1] : vector<2x320xf32> to vector<2xf32>
    %100 = vector.shape_cast %99 : vector<2xf32> to vector<2x1xf32>
    %101 = vector.broadcast %91 : vector<1x320xf32> to vector<2x320xf32>
    %102 = arith.mulf %92, %101 : vector<2x320xf32>
    %cst_39 = arith.constant dense<0.000000e+00> : vector<2xf32>
    %103 = vector.multi_reduction <add>, %102, %cst_39 [1] : vector<2x320xf32> to vector<2xf32>
    %104 = vector.shape_cast %103 : vector<2xf32> to vector<2x1xf32>
    %105 = vector.shape_cast %98 : vector<2x1xf32> to vector<1x2x1xf32>
    %cst_40 = arith.constant dense<0.000000e+00> : vector<1xf32>
    %106 = vector.multi_reduction <add>, %105, %cst_40 [1, 2] : vector<1x2x1xf32> to vector<1xf32>
    %107 = vector.shape_cast %106 : vector<1xf32> to vector<1x1x1xf32>
    %108 = vector.extract %107[0, 0, 0] : f32 from vector<1x1x1xf32>
    %109 = arith.subf %94, %98 : vector<2x1xf32>
    %110 = vector.shape_cast %109 : vector<2x1xf32> to vector<1x2x1xf32>
    %cst_41 = arith.constant dense<0.000000e+00> : vector<1xf32>
    %111 = vector.multi_reduction <add>, %110, %cst_41 [1, 2] : vector<1x2x1xf32> to vector<1xf32>
    %112 = vector.shape_cast %111 : vector<1xf32> to vector<1x1x1xf32>
    %113 = vector.extract %112[0, 0, 0] : f32 from vector<1x1x1xf32>
    %114 = vector.shape_cast %104 : vector<2x1xf32> to vector<1x2x1xf32>
    %cst_42 = arith.constant dense<0.000000e+00> : vector<1xf32>
    %115 = vector.multi_reduction <add>, %114, %cst_42 [1, 2] : vector<1x2x1xf32> to vector<1xf32>
    %116 = vector.shape_cast %115 : vector<1xf32> to vector<1x1x1xf32>
    %117 = vector.extract %116[0, 0, 0] : f32 from vector<1x1x1xf32>
    %118 = arith.subf %100, %104 : vector<2x1xf32>
    %119 = vector.shape_cast %118 : vector<2x1xf32> to vector<1x2x1xf32>
    %cst_43 = arith.constant dense<0.000000e+00> : vector<1xf32>
    %120 = vector.multi_reduction <add>, %119, %cst_43 [1, 2] : vector<1x2x1xf32> to vector<1xf32>
    %121 = vector.shape_cast %120 : vector<1xf32> to vector<1x1x1xf32>
    %122 = vector.extract %121[0, 0, 0] : f32 from vector<1x1x1xf32>
    %cst_44 = arith.constant 3.125000e-03 : f32
    %123 = arith.mulf %108, %cst_44 : f32
    %cst_45 = arith.constant 3.125000e-03 : f32
    %124 = arith.mulf %113, %cst_45 : f32
    %cst_46 = arith.constant 3.125000e-03 : f32
    %125 = arith.mulf %117, %cst_46 : f32
    %126 = arith.mulf %123, %123 : f32
    %127 = arith.subf %125, %126 : f32
    %cst_47 = arith.constant 0.000000e+00 : f32
    %128 = arith.maximumf %127, %cst_47 : f32
    %cst_48 = arith.constant 3.125000e-03 : f32
    %129 = arith.mulf %122, %cst_48 : f32
    %130 = arith.mulf %124, %124 : f32
    %131 = arith.subf %129, %130 : f32
    %cst_49 = arith.constant 0.000000e+00 : f32
    %132 = arith.maximumf %131, %cst_49 : f32
    %c2 = arith.constant 2 : index
    %c0_50 = arith.constant 0 : index
    %133 = memref.load %arg0[%c2, %c0_50] : memref<6x2xf32, #tpu.memory_space<smem>>
    %c2_51 = arith.constant 2 : index
    %c1_52 = arith.constant 1 : index
    %134 = memref.load %arg0[%c2_51, %c1_52] : memref<6x2xf32, #tpu.memory_space<smem>>
    %c3 = arith.constant 3 : index
    %c0_53 = arith.constant 0 : index
    %135 = memref.load %arg0[%c3, %c0_53] : memref<6x2xf32, #tpu.memory_space<smem>>
    %c3_54 = arith.constant 3 : index
    %c1_55 = arith.constant 1 : index
    %136 = memref.load %arg0[%c3_54, %c1_55] : memref<6x2xf32, #tpu.memory_space<smem>>
    %cst_56 = arith.constant 9.99999974E-6 : f32
    %137 = arith.addf %128, %cst_56 : f32
    %138 = math.rsqrt %137 : f32
    %139 = arith.mulf %133, %138 : f32
    %cst_57 = arith.constant 9.99999974E-6 : f32
    %140 = arith.addf %132, %cst_57 : f32
    %141 = math.rsqrt %140 : f32
    %142 = arith.mulf %134, %141 : f32
    %143 = arith.mulf %123, %139 : f32
    %144 = arith.subf %135, %143 : f32
    %145 = arith.mulf %124, %142 : f32
    %146 = arith.subf %136, %145 : f32
    %147 = vector.broadcast %142 : f32 to vector<1x320xf32>
    %148 = vector.broadcast %139 : f32 to vector<1x320xf32>
    %149 = arith.select %87, %147, %148 : vector<1x320xi1>, vector<1x320xf32>
    %150 = vector.broadcast %146 : f32 to vector<1x320xf32>
    %151 = vector.broadcast %144 : f32 to vector<1x320xf32>
    %152 = arith.select %87, %150, %151 : vector<1x320xi1>, vector<1x320xf32>
    %153 = vector.broadcast %149 : vector<1x320xf32> to vector<2x320xf32>
    %154 = arith.mulf %84, %153 : vector<2x320xf32>
    %155 = vector.broadcast %152 : vector<1x320xf32> to vector<2x320xf32>
    %156 = arith.addf %154, %155 : vector<2x320xf32>
    %cst_58 = arith.constant 0.000000e+00 : f32
    %157 = vector.broadcast %cst_58 : f32 to vector<2x320xf32>
    %158 = arith.maximumf %156, %157 : vector<2x320xf32>
    %c0_59 = arith.constant 0 : index
    %c0_60 = arith.constant 0 : index
    %159 = vector.load %arg6[%c0_59, %c0_60] : memref<320x84xf32, #tpu.memory_space<vmem>>, vector<320x84xf32>
    %cst_61 = arith.constant dense<0.000000e+00> : vector<2x84xf32>
    %160 = tpu.matmul %158, %159, %cst_61 {dimension_numbers = #tpu.dot_dimension_numbers<[1], [0], [0], [1], [0, 0, 1, 1], [], []>} : vector<2x320xf32>, vector<320x84xf32>, vector<2x84xf32> -> vector<2x84xf32>
    %c0_62 = arith.constant 0 : index
    %c0_63 = arith.constant 0 : index
    %161 = vector.load %arg7[%c0_62, %c0_63] : memref<1x84xf32, #tpu.memory_space<vmem>>, vector<1x84xf32>
    %162 = vector.broadcast %161 : vector<1x84xf32> to vector<2x84xf32>
    %163 = arith.addf %160, %162 : vector<2x84xf32>
    %164 = tpu.iota {dimensions = array<i32: 1>} : vector<1x84xi32>
    %c42_i32 = arith.constant 42 : i32
    %165 = vector.broadcast %c42_i32 : i32 to vector<1x84xi32>
    %166 = arith.cmpi sge, %164, %165 : vector<1x84xi32>
    %c42_i32_64 = arith.constant 42 : i32
    %167 = vector.broadcast %c42_i32_64 : i32 to vector<1x84xi32>
    %168 = arith.cmpi slt, %164, %167 : vector<1x84xi32>
    %169 = arith.extui %168 : vector<1x84xi1> to vector<1x84xi32>
    %170 = arith.sitofp %169 : vector<1x84xi32> to vector<1x84xf32>
    %171 = arith.mulf %163, %163 : vector<2x84xf32>
    %cst_65 = arith.constant dense<0.000000e+00> : vector<2xf32>
    %172 = vector.multi_reduction <add>, %163, %cst_65 [1] : vector<2x84xf32> to vector<2xf32>
    %173 = vector.shape_cast %172 : vector<2xf32> to vector<2x1xf32>
    %174 = vector.broadcast %170 : vector<1x84xf32> to vector<2x84xf32>
    %175 = arith.mulf %163, %174 : vector<2x84xf32>
    %cst_66 = arith.constant dense<0.000000e+00> : vector<2xf32>
    %176 = vector.multi_reduction <add>, %175, %cst_66 [1] : vector<2x84xf32> to vector<2xf32>
    %177 = vector.shape_cast %176 : vector<2xf32> to vector<2x1xf32>
    %cst_67 = arith.constant dense<0.000000e+00> : vector<2xf32>
    %178 = vector.multi_reduction <add>, %171, %cst_67 [1] : vector<2x84xf32> to vector<2xf32>
    %179 = vector.shape_cast %178 : vector<2xf32> to vector<2x1xf32>
    %180 = vector.broadcast %170 : vector<1x84xf32> to vector<2x84xf32>
    %181 = arith.mulf %171, %180 : vector<2x84xf32>
    %cst_68 = arith.constant dense<0.000000e+00> : vector<2xf32>
    %182 = vector.multi_reduction <add>, %181, %cst_68 [1] : vector<2x84xf32> to vector<2xf32>
    %183 = vector.shape_cast %182 : vector<2xf32> to vector<2x1xf32>
    %184 = vector.shape_cast %177 : vector<2x1xf32> to vector<1x2x1xf32>
    %cst_69 = arith.constant dense<0.000000e+00> : vector<1xf32>
    %185 = vector.multi_reduction <add>, %184, %cst_69 [1, 2] : vector<1x2x1xf32> to vector<1xf32>
    %186 = vector.shape_cast %185 : vector<1xf32> to vector<1x1x1xf32>
    %187 = vector.extract %186[0, 0, 0] : f32 from vector<1x1x1xf32>
    %188 = arith.subf %173, %177 : vector<2x1xf32>
    %189 = vector.shape_cast %188 : vector<2x1xf32> to vector<1x2x1xf32>
    %cst_70 = arith.constant dense<0.000000e+00> : vector<1xf32>
    %190 = vector.multi_reduction <add>, %189, %cst_70 [1, 2] : vector<1x2x1xf32> to vector<1xf32>
    %191 = vector.shape_cast %190 : vector<1xf32> to vector<1x1x1xf32>
    %192 = vector.extract %191[0, 0, 0] : f32 from vector<1x1x1xf32>
    %193 = vector.shape_cast %183 : vector<2x1xf32> to vector<1x2x1xf32>
    %cst_71 = arith.constant dense<0.000000e+00> : vector<1xf32>
    %194 = vector.multi_reduction <add>, %193, %cst_71 [1, 2] : vector<1x2x1xf32> to vector<1xf32>
    %195 = vector.shape_cast %194 : vector<1xf32> to vector<1x1x1xf32>
    %196 = vector.extract %195[0, 0, 0] : f32 from vector<1x1x1xf32>
    %197 = arith.subf %179, %183 : vector<2x1xf32>
    %198 = vector.shape_cast %197 : vector<2x1xf32> to vector<1x2x1xf32>
    %cst_72 = arith.constant dense<0.000000e+00> : vector<1xf32>
    %199 = vector.multi_reduction <add>, %198, %cst_72 [1, 2] : vector<1x2x1xf32> to vector<1xf32>
    %200 = vector.shape_cast %199 : vector<1xf32> to vector<1x1x1xf32>
    %201 = vector.extract %200[0, 0, 0] : f32 from vector<1x1x1xf32>
    %cst_73 = arith.constant 0.0119047621 : f32
    %202 = arith.mulf %187, %cst_73 : f32
    %cst_74 = arith.constant 0.0119047621 : f32
    %203 = arith.mulf %192, %cst_74 : f32
    %cst_75 = arith.constant 0.0119047621 : f32
    %204 = arith.mulf %196, %cst_75 : f32
    %205 = arith.mulf %202, %202 : f32
    %206 = arith.subf %204, %205 : f32
    %cst_76 = arith.constant 0.000000e+00 : f32
    %207 = arith.maximumf %206, %cst_76 : f32
    %cst_77 = arith.constant 0.0119047621 : f32
    %208 = arith.mulf %201, %cst_77 : f32
    %209 = arith.mulf %203, %203 : f32
    %210 = arith.subf %208, %209 : f32
    %cst_78 = arith.constant 0.000000e+00 : f32
    %211 = arith.maximumf %210, %cst_78 : f32
    %c4 = arith.constant 4 : index
    %c0_79 = arith.constant 0 : index
    %212 = memref.load %arg0[%c4, %c0_79] : memref<6x2xf32, #tpu.memory_space<smem>>
    %c4_80 = arith.constant 4 : index
    %c1_81 = arith.constant 1 : index
    %213 = memref.load %arg0[%c4_80, %c1_81] : memref<6x2xf32, #tpu.memory_space<smem>>
    %c5 = arith.constant 5 : index
    %c0_82 = arith.constant 0 : index
    %214 = memref.load %arg0[%c5, %c0_82] : memref<6x2xf32, #tpu.memory_space<smem>>
    %c5_83 = arith.constant 5 : index
    %c1_84 = arith.constant 1 : index
    %215 = memref.load %arg0[%c5_83, %c1_84] : memref<6x2xf32, #tpu.memory_space<smem>>
    %cst_85 = arith.constant 9.99999974E-6 : f32
    %216 = arith.addf %207, %cst_85 : f32
    %217 = math.rsqrt %216 : f32
    %218 = arith.mulf %212, %217 : f32
    %cst_86 = arith.constant 9.99999974E-6 : f32
    %219 = arith.addf %211, %cst_86 : f32
    %220 = math.rsqrt %219 : f32
    %221 = arith.mulf %213, %220 : f32
    %222 = arith.mulf %202, %218 : f32
    %223 = arith.subf %214, %222 : f32
    %224 = arith.mulf %203, %221 : f32
    %225 = arith.subf %215, %224 : f32
    %226 = vector.broadcast %221 : f32 to vector<1x84xf32>
    %227 = vector.broadcast %218 : f32 to vector<1x84xf32>
    %228 = arith.select %166, %226, %227 : vector<1x84xi1>, vector<1x84xf32>
    %229 = vector.broadcast %225 : f32 to vector<1x84xf32>
    %230 = vector.broadcast %223 : f32 to vector<1x84xf32>
    %231 = arith.select %166, %229, %230 : vector<1x84xi1>, vector<1x84xf32>
    %232 = vector.broadcast %228 : vector<1x84xf32> to vector<2x84xf32>
    %233 = arith.mulf %163, %232 : vector<2x84xf32>
    %234 = vector.broadcast %231 : vector<1x84xf32> to vector<2x84xf32>
    %235 = arith.addf %233, %234 : vector<2x84xf32>
    %c0_87 = arith.constant 0 : index
    %c0_88 = arith.constant 0 : index
    %236 = vector.load %arg8[%c0_87, %c0_88] : memref<84x14xf32, #tpu.memory_space<vmem>>, vector<84x14xf32>
    %cst_89 = arith.constant dense<0.000000e+00> : vector<2x14xf32>
    %237 = tpu.matmul %235, %236, %cst_89 {dimension_numbers = #tpu.dot_dimension_numbers<[1], [0], [0], [1], [0, 0, 1, 1], [], []>} : vector<2x84xf32>, vector<84x14xf32>, vector<2x14xf32> -> vector<2x14xf32>
    %c0_90 = arith.constant 0 : index
    %c0_91 = arith.constant 0 : index
    %238 = vector.load %arg9[%c0_90, %c0_91] : memref<1x14xf32, #tpu.memory_space<vmem>>, vector<1x14xf32>
    %239 = vector.broadcast %238 : vector<1x14xf32> to vector<2x14xf32>
    %240 = arith.addf %237, %239 : vector<2x14xf32>
    %cst_92 = arith.constant 0.000000e+00 : f32
    %241 = vector.broadcast %cst_92 : f32 to vector<2x14xf32>
    %242 = arith.maximumf %240, %241 : vector<2x14xf32>
    %c0_93 = arith.constant 0 : index
    %c0_94 = arith.constant 0 : index
    %243 = vector.load %arg10[%c0_93, %c0_94] : memref<14x7xf32, #tpu.memory_space<vmem>>, vector<14x7xf32>
    %cst_95 = arith.constant dense<0.000000e+00> : vector<2x7xf32>
    %244 = tpu.matmul %242, %243, %cst_95 {dimension_numbers = #tpu.dot_dimension_numbers<[1], [0], [0], [1], [0, 0, 1, 1], [], []>} : vector<2x14xf32>, vector<14x7xf32>, vector<2x7xf32> -> vector<2x7xf32>
    %c0_96 = arith.constant 0 : index
    %c0_97 = arith.constant 0 : index
    %245 = vector.load %arg11[%c0_96, %c0_97] : memref<1x7xf32, #tpu.memory_space<vmem>>, vector<1x7xf32>
    %246 = vector.broadcast %245 : vector<1x7xf32> to vector<2x7xf32>
    %247 = arith.addf %244, %246 : vector<2x7xf32>
    %cst_98 = arith.constant dense<0xFF800000> : vector<2xf32>
    %248 = vector.multi_reduction <maximumf>, %247, %cst_98 [1] : vector<2x7xf32> to vector<2xf32>
    %249 = vector.shape_cast %248 : vector<2xf32> to vector<2x1xf32>
    %250 = vector.broadcast %249 : vector<2x1xf32> to vector<2x7xf32>
    %251 = arith.subf %247, %250 : vector<2x7xf32>
    %252 = math.exp %251 : vector<2x7xf32>
    %cst_99 = arith.constant dense<0.000000e+00> : vector<2xf32>
    %253 = vector.multi_reduction <add>, %252, %cst_99 [1] : vector<2x7xf32> to vector<2xf32>
    %254 = vector.shape_cast %253 : vector<2xf32> to vector<2x1xf32>
    %255 = vector.broadcast %254 : vector<2x1xf32> to vector<2x7xf32>
    %256 = arith.divf %252, %255 : vector<2x7xf32>
    %c0_100 = arith.constant 0 : index
    %c0_101 = arith.constant 0 : index
    %257 = vector.load %arg12[%c0_100, %c0_101] : memref<2x7xf32, #tpu.memory_space<vmem>>, vector<2x7xf32>
    tpu.vector_store %arg12[%c0_100, %c0_101], %256 {strides = array<i32>} : memref<2x7xf32, #tpu.memory_space<vmem>>, vector<2x7xf32>,
    return
  }
}

</mosaic_0001>

<llo_original>
// kernel: tpu_custom_call.1
$region0: #{tpu_custom_call.1}
  #allocation0 [shape = 'u32[]', space=smem, size = 0x4, offset = 0x4, fixed_abs, tag = 'smem constant byte address 0x4 - core index']
  #allocation1 [shape = 'u32[72,128]{1,0:T(1,128)}', space=vmem, size = 0x9000, scoped, tag = 'internal scratch']
  %s0 = inlined_call_operand.vmem [shape: f32[6,2], index: 0, kind: input, shape index: {}]
  %s1 = inlined_call_operand.vmem [shape: f32[2,84], index: 1, kind: input, shape index: {}]
  %s2 = inlined_call_operand.vmem [shape: f32[84,160], index: 2, kind: input, shape index: {}]
  %s3 = inlined_call_operand.vmem [shape: f32[1,160], index: 3, kind: input, shape index: {}]
  %s4 = inlined_call_operand.vmem [shape: f32[160,320], index: 4, kind: input, shape index: {}]
  %s5 = inlined_call_operand.vmem [shape: f32[1,320], index: 5, kind: input, shape index: {}]
  %s6 = inlined_call_operand.vmem [shape: f32[320,84], index: 6, kind: input, shape index: {}]
  %s7 = inlined_call_operand.vmem [shape: f32[1,84], index: 7, kind: input, shape index: {}]
  %s8 = inlined_call_operand.vmem [shape: f32[84,14], index: 8, kind: input, shape index: {}]
  %s9 = inlined_call_operand.vmem [shape: f32[1,14], index: 9, kind: input, shape index: {}]
  %s10 = inlined_call_operand.vmem [shape: f32[14,7], index: 10, kind: input, shape index: {}]
  %s11 = inlined_call_operand.vmem [shape: f32[1,7], index: 11, kind: input, shape index: {}]
  %s12 = inlined_call_operand.hbm [shape: f32[2,7], index: 12, kind: output, shape index: {}]
  %s13 = sld [smem:[#allocation0]]
  $region62: #{tpu_custom_call.1} parent=0
    _
  %s15 = ssub.s32 1, %s13
  %s16 = scalar_select 0, %s15, %s13
  $region1: #{tpu_custom_call.1} parent=0
    #allocation2 [shape = 'u8[4096]{0}', space=smem, size = 0x1000, scoped, tag = 'input window, operand 0, single buffered']
    #allocation3 [shape = 's32[1]{0}', space=sflag, size = 0x4, scoped, tag = 'scoped memory for tpu_custom_call.1']
    #allocation4 [shape = 's32[1]{0}', space=sflag, size = 0x4, scoped, tag = 'scoped memory for tpu_custom_call.1']
    #allocation5 [shape = 'u8[1024]{0}', space=vmem, size = 0x400, scoped, tag = 'output window, operand 0, single buffered']
    %17 = vsyncpa [#allocation4], 0
    %18 = vsyncpa [#allocation3], 0
    // Predicated region
    $region2: #{tpu_custom_call.1} parent=1 // pred_check
      _
    $region3: #{tpu_custom_call.1} parent=1 // pred_check_branch
      %20 = sbr.rel (0) target = $region5
    $region4: #{tpu_custom_call.1} parent=1 // pred_region
      %22 = vsyncadd [#allocation4], 0
      %s24 = sshll.u32 %s0, 4
      %s25 = int_to_ptr.vmem [resolvable:$true] %s24
      %27 = dma.vmem_to_smem %s25, 128, [#allocation2], [#allocation4]
    $region5: #{tpu_custom_call.1} parent=1 // pred_fallthru
      _
    // Predicated region
    $region6: #{tpu_custom_call.1} parent=1 // pred_check
      _
    $region7: #{tpu_custom_call.1} parent=1 // pred_check_branch
      %29 = sbr.rel (0) target = $region9
    $region8: #{tpu_custom_call.1} parent=1 // pred_region
      _
    $region9: #{tpu_custom_call.1} parent=1 // pred_fallthru
      _
    // Predicated region
    $region10: #{tpu_custom_call.1} parent=1 // pred_check
      _
    $region11: #{tpu_custom_call.1} parent=1 // pred_check_branch
      %31 = sbr.rel (0) target = $region13
    $region12: #{tpu_custom_call.1} parent=1 // pred_region
      _
    $region13: #{tpu_custom_call.1} parent=1 // pred_fallthru
      _
    // Predicated region
    $region14: #{tpu_custom_call.1} parent=1 // pred_check
      _
    $region15: #{tpu_custom_call.1} parent=1 // pred_check_branch
      %33 = sbr.rel (0) target = $region17
    $region16: #{tpu_custom_call.1} parent=1 // pred_region
      _
    $region17: #{tpu_custom_call.1} parent=1 // pred_fallthru
      _
    // Predicated region
    $region18: #{tpu_custom_call.1} parent=1 // pred_check
      _
    $region19: #{tpu_custom_call.1} parent=1 // pred_check_branch
      %35 = sbr.rel (0) target = $region21
    $region20: #{tpu_custom_call.1} parent=1 // pred_region
      _
    $region21: #{tpu_custom_call.1} parent=1 // pred_fallthru
      _
    // Predicated region
    $region22: #{tpu_custom_call.1} parent=1 // pred_check
      _
    $region23: #{tpu_custom_call.1} parent=1 // pred_check_branch
      %37 = sbr.rel (0) target = $region25
    $region24: #{tpu_custom_call.1} parent=1 // pred_region
      _
    $region25: #{tpu_custom_call.1} parent=1 // pred_fallthru
      _
    // Predicated region
    $region26: #{tpu_custom_call.1} parent=1 // pred_check
      _
    $region27: #{tpu_custom_call.1} parent=1 // pred_check_branch
      %39 = sbr.rel (0) target = $region29
    $region28: #{tpu_custom_call.1} parent=1 // pred_region
      _
    $region29: #{tpu_custom_call.1} parent=1 // pred_fallthru
      _
    // Predicated region
    $region30: #{tpu_custom_call.1} parent=1 // pred_check
      _
    $region31: #{tpu_custom_call.1} parent=1 // pred_check_branch
      %41 = sbr.rel (0) target = $region33
    $region32: #{tpu_custom_call.1} parent=1 // pred_region
      _
    $region33: #{tpu_custom_call.1} parent=1 // pred_fallthru
      _
    // Predicated region
    $region34: #{tpu_custom_call.1} parent=1 // pred_check
      _
    $region35: #{tpu_custom_call.1} parent=1 // pred_check_branch
      %43 = sbr.rel (0) target = $region37
    $region36: #{tpu_custom_call.1} parent=1 // pred_region
      _
    $region37: #{tpu_custom_call.1} parent=1 // pred_fallthru
      _
    // Predicated region
    $region38: #{tpu_custom_call.1} parent=1 // pred_check
      _
    $region39: #{tpu_custom_call.1} parent=1 // pred_check_branch
      %45 = sbr.rel (0) target = $region41
    $region40: #{tpu_custom_call.1} parent=1 // pred_region
      _
    $region41: #{tpu_custom_call.1} parent=1 // pred_fallthru
      _
    // Predicated region
    $region42: #{tpu_custom_call.1} parent=1 // pred_check
      _
    $region43: #{tpu_custom_call.1} parent=1 // pred_check_branch
      %47 = sbr.rel (0) target = $region45
    $region44: #{tpu_custom_call.1} parent=1 // pred_region
      _
    $region45: #{tpu_custom_call.1} parent=1 // pred_fallthru
      _
    // Predicated region
    $region46: #{tpu_custom_call.1} parent=1 // pred_check
      _
    $region47: #{tpu_custom_call.1} parent=1 // pred_check_branch
      %49 = sbr.rel (0) target = $region49
    $region48: #{tpu_custom_call.1} parent=1 // pred_region
      _
    $region49: #{tpu_custom_call.1} parent=1 // pred_fallthru
      _
    // Predicated region
    $region50: #{tpu_custom_call.1} parent=1 // pred_check
      _
    $region51: #{tpu_custom_call.1} parent=1 // pred_check_branch
      %51 = sbr.rel (0) target = $region53
    $region52: #{tpu_custom_call.1} parent=1 // pred_region
      %53 = dma.done [#allocation4], 128
    $region53: #{tpu_custom_call.1} parent=1 // pred_fallthru
      _
    %54 = sfence
    %v55 = vld [vmem:[%s1] sm:$0x3]
    %v56 = vld [vmem:[%s2] sm:$0xff]
    %v57 = vld [vmem:[%s2 + $0x8] sm:$0xff]
    %v58 = vld [vmem:[%s2 + $0x10] sm:$0xff]
    %v59 = vld [vmem:[%s2 + $0x18] sm:$0xff]
    %v60 = vld [vmem:[%s2 + $0x20] sm:$0xff]
    %v61 = vld [vmem:[%s2 + $0x28] sm:$0xff]
    %v62 = vld [vmem:[%s2 + $0x30] sm:$0xff]
    %v63 = vld [vmem:[%s2 + $0x38] sm:$0xff]
    %v64 = vld [vmem:[%s2 + $0x40] sm:$0xff]
    %v65 = vld [vmem:[%s2 + $0x48] sm:$0xff]
    %v66 = vld [vmem:[%s2 + $0x50] sm:$0xff]
    %v67 = vld [vmem:[%s2 + $0x58] sm:$0xff]
    %v68 = vld [vmem:[%s2 + $0x60] sm:$0xff]
    %v69 = vld [vmem:[%s2 + $0x68] sm:$0xff]
    %v70 = vld [vmem:[%s2 + $0x70] sm:$0xff]
    %v71 = vld [vmem:[%s2 + $0x78] sm:$0xff]
    %v72 = vld [vmem:[%s2 + $0x80] sm:$0xff]
    %v73 = vld [vmem:[%s2 + $0x88] sm:$0xff]
    %v74 = vld [vmem:[%s2 + $0x90] sm:$0xff]
    %v75 = vld [vmem:[%s2 + $0x98] sm:$0xff]
    %v76 = vld [vmem:[%s2 + $0xa0] sm:$0xf]
    %v77 = vld [vmem:[%s2 + $0xa8] sm:$0xf]
    %v78 = vld [vmem:[%s3] sm:$0x3]
    %v80 = vperm.slane %v78, 0
    %v81 = vperm.slane %v78, 1
    %vm84 = vcmask 687104
    %v86 = vsel %vm84, %v55, 0
    %vm88 = vcmask 1043456
    %v90 = vsel %vm88, %v76, 0
    %v93 = vsel %vm88, %v77, 0
    %95 = vmatpush.msra.mxu0 0.0
    %96 = vmatpush.msra.mxu0 0.0
    %97 = vmatpush.msra.mxu0 0.0
    %98 = vmatpush.msra.mxu0 0.0
    %99 = vmatpush.msra.mxu0 0.0
    %100 = vmatpush.msra.mxu0 %v90
    %101 = vmatpush.msra.mxu0 %v74
    %102 = vmatpush.msra.mxu0 %v72
    %103 = vmatpush.msra.mxu0 %v70
    %104 = vmatpush.msra.mxu0 %v68
    %105 = vmatpush.msra.mxu0 %v66
    %106 = vmatpush.msra.mxu0 %v64
    %107 = vmatpush.msra.mxu0 %v62
    %108 = vmatpush.msra.mxu0 %v60
    %109 = vmatpush.msra.mxu0 %v58
    %110 = vmatpush.msra.mxu0 %v56
    %111 = vmatmul.f32.gmra.mxu0 %v86
    %v112 = vpop.f32.mrf.mxu0
    %v113 = vadd.f32 %v80, %v112
    %114 = vdwg.mxu0
    %115 = vmatpush.msra.mxu0 0.0
    %116 = vmatpush.msra.mxu0 0.0
    %117 = vmatpush.msra.mxu0 0.0
    %118 = vmatpush.msra.mxu0 0.0
    %119 = vmatpush.msra.mxu0 0.0
    %120 = vmatpush.msra.mxu0 %v93
    %121 = vmatpush.msra.mxu0 %v75
    %122 = vmatpush.msra.mxu0 %v73
    %123 = vmatpush.msra.mxu0 %v71
    %124 = vmatpush.msra.mxu0 %v69
    %125 = vmatpush.msra.mxu0 %v67
    %126 = vmatpush.msra.mxu0 %v65
    %127 = vmatpush.msra.mxu0 %v63
    %128 = vmatpush.msra.mxu0 %v61
    %129 = vmatpush.msra.mxu0 %v59
    %130 = vmatpush.msra.mxu0 %v57
    %131 = vmatmul.f32.gmra.mxu0 %v86
    %v132 = vpop.f32.mrf.mxu0
    %v133 = vadd.f32 %v81, %v132
    %134 = vdwg.mxu0
    %v135 = vlaneseq
    %v136 = vand.u32 %v135, 127
    %v137 = vadd.s32 %v136, 128
    %vm138 = vcmp.ge.s32.totalorder %v136, 80
    %vm139 = vcmp.ge.s32.totalorder %v137, 80
    %vm140 = vcmp.lt.s32.totalorder %v136, 80
    %vm141 = vcmp.lt.s32.totalorder %v137, 80
    %v142 = vsel %vm140, 1, 0
    %v143 = vsel %vm141, 1, 0
    %v144 = vcvt.s32.f32 %v142
    %v145 = vcvt.s32.f32 %v143
    %v146 = vmul.f32 %v113, %v113
    %v147 = vmul.f32 %v133, %v133
    %vm148 = vcmask 1041408
    %v149 = vsel %vm148, %v113, 0.0
    %vm150 = vcmask 254976
    %v151 = vsel %vm150, %v133, 0.0
    %v152 = vadd.f32 %v149, %v151
    %153 = vadd.xlane.f32.xlu0 %v152
    %v154 = vpop.xlane.xlu0 %153
    %v155 = vmul.f32 %v113, %v144
    %v156 = vmul.f32 %v133, %v145
    %v157 = vsel %vm148, %v155, 0.0
    %v158 = vsel %vm150, %v156, 0.0
    %v159 = vadd.f32 %v157, %v158
    %160 = vadd.xlane.f32.xlu0 %v159
    %v161 = vpop.xlane.xlu0 %160
    %v162 = vsel %vm148, %v146, 0.0
    %v163 = vsel %vm150, %v147, 0.0
    %v164 = vadd.f32 %v162, %v163
    %165 = vadd.xlane.f32.xlu0 %v164
    %v166 = vpop.xlane.xlu0 %165
    %v167 = vmul.f32 %v146, %v144
    %v168 = vmul.f32 %v147, %v145
    %v169 = vsel %vm148, %v167, 0.0
    %v170 = vsel %vm150, %v168, 0.0
    %v171 = vadd.f32 %v169, %v170
    %172 = vadd.xlane.f32.xlu0 %v171
    %v173 = vpop.xlane.xlu0 %172
    %vm174 = vcmask 1024
    %v175 = vsel %vm174, %v161, 0.0
    %176 = vadd.xlane.f32.xlu0 %v175
    %v177 = vpop.xlane.xlu0 %176
    %v178 = vrot.slane %v177, 4
    %v179 = vadd.f32 %v177, %v178
    %v180 = vrot.slane %v179, 2
    %v181 = vadd.f32 %v179, %v180
    %v182 = vrot.slane %v181, 1
    %v183 = vadd.f32 %v181, %v182
    %s184 = vtos %v183
    %v185 = vsub.f32 %v154, %v161
    %v186 = vsel %vm174, %v185, 0.0
    %187 = vadd.xlane.f32.xlu0 %v186
    %v188 = vpop.xlane.xlu0 %187
    %v189 = vrot.slane %v188, 4
    %v190 = vadd.f32 %v188, %v189
    %v191 = vrot.slane %v190, 2
    %v192 = vadd.f32 %v190, %v191
    %v193 = vrot.slane %v192, 1
    %v194 = vadd.f32 %v192, %v193
    %s195 = vtos %v194
    %v196 = vsel %vm174, %v173, 0.0
    %197 = vadd.xlane.f32.xlu0 %v196
    %v198 = vpop.xlane.xlu0 %197
    %v199 = vrot.slane %v198, 4
    %v200 = vadd.f32 %v198, %v199
    %v201 = vrot.slane %v200, 2
    %v202 = vadd.f32 %v200, %v201
    %v203 = vrot.slane %v202, 1
    %v204 = vadd.f32 %v202, %v203
    %s205 = vtos %v204
    %v206 = vsub.f32 %v166, %v173
    %v207 = vsel %vm174, %v206, 0.0
    %208 = vadd.xlane.f32.xlu0 %v207
    %v209 = vpop.xlane.xlu0 %208
    %v210 = vrot.slane %v209, 4
    %v211 = vadd.f32 %v209, %v210
    %v212 = vrot.slane %v211, 2
    %v213 = vadd.f32 %v211, %v212
    %v214 = vrot.slane %v213, 1
    %v215 = vadd.f32 %v213, %v214
    %s216 = vtos %v215
    %s217 = smul.f32 %s184, 0.00625
    %s218 = smul.f32 %s195, 0.00625
    %s219 = smul.f32 %s205, 0.00625
    %s220 = smul.f32 %s217, %s217
    %s221 = ssub.f32 %s219, %s220
    %s222 = smax.f32 %s221, 0.0
    %s223 = smul.f32 %s216, 0.00625
    %s224 = smul.f32 %s218, %s218
    %s225 = ssub.f32 %s223, %s224
    %s226 = smax.f32 %s225, 0.0
    %s227 = sld [smem:[#allocation2]]
    %s228 = sld [smem:[#allocation2 + $0x1]]
    %s229 = sld [smem:[#allocation2 + $0x80]]
    %s230 = sld [smem:[#allocation2 + $0x81]]
    %s231 = sadd.f32 %s222, 1e-05
    %v232 = vstv %s231
    %v233 = vrsqrt.pop %v232
    %v234 = vmul.f32 %v233, %v232
    %v235 = vmul.f32 %v234, %v233
    %v236 = vmul.f32 0.5, %v235
    %v237 = vsub.f32 1.5, %v236
    %v238 = vmul.f32 %v233, %v237
    %vm239 = vweird.f32 %v232
    %vm240 = vweird.f32 %v233
    %vm241 = vmor %vm239, %vm240
    %v242 = vsel %vm241, %v233, %v238
    %s243 = vtos %v242
    %s244 = smul.f32 %s227, %s243
    %s245 = sadd.f32 %s226, 1e-05
    %v246 = vstv %s245
    %v247 = vrsqrt.pop %v246
    %v248 = vmul.f32 %v247, %v246
    %v249 = vmul.f32 %v248, %v247
    %v250 = vmul.f32 0.5, %v249
    %v251 = vsub.f32 1.5, %v250
    %v252 = vmul.f32 %v247, %v251
    %vm253 = vweird.f32 %v246
    %vm254 = vweird.f32 %v247
    %vm255 = vmor %vm253, %vm254
    %v256 = vsel %vm255, %v247, %v252
    %s257 = vtos %v256
    %s258 = smul.f32 %s228, %s257
    %s259 = smul.f32 %s217, %s244
    %s260 = ssub.f32 %s229, %s259
    %s261 = smul.f32 %s218, %s258
    %s262 = ssub.f32 %s230, %s261
    %v263 = vstv %s258
    %v264 = vstv %s244
    %v265 = vsel %vm138, %v263, %v264
    %v266 = vsel %vm139, %v263, %v264
    %v267 = vstv %s262
    %v268 = vstv %s260
    %v269 = vsel %vm138, %v267, %v268
    %v270 = vsel %vm139, %v267, %v268
    %v271 = vmul.f32 %v113, %v265
    %v272 = vmul.f32 %v133, %v266
    %v273 = vadd.f32 %v271, %v269
    %v274 = vadd.f32 %v272, %v270
    %v275 = vmax.f32 %v273, 0.0
    %v276 = vmax.f32 %v274, 0.0
    %v277 = vld [vmem:[%s4] sm:$0xff]
    %v278 = vld [vmem:[%s4 + $0x8] sm:$0xff]
    %v279 = vld [vmem:[%s4 + $0x10] sm:$0xff]
    %v280 = vld [vmem:[%s4 + $0x18] sm:$0xff]
    %v281 = vld [vmem:[%s4 + $0x20] sm:$0xff]
    %v282 = vld [vmem:[%s4 + $0x28] sm:$0xff]
    %v283 = vld [vmem:[%s4 + $0x30] sm:$0xff]
    %v284 = vld [vmem:[%s4 + $0x38] sm:$0xff]
    %v285 = vld [vmem:[%s4 + $0x40] sm:$0xff]
    %v286 = vld [vmem:[%s4 + $0x48] sm:$0xff]
    %v287 = vld [vmem:[%s4 + $0x50] sm:$0xff]
    %v288 = vld [vmem:[%s4 + $0x58] sm:$0xff]
    %v289 = vld [vmem:[%s4 + $0x60] sm:$0xff]
    %v290 = vld [vmem:[%s4 + $0x68] sm:$0xff]
    %v291 = vld [vmem:[%s4 + $0x70] sm:$0xff]
    %v292 = vld [vmem:[%s4 + $0x78] sm:$0xff]
    %v293 = vld [vmem:[%s4 + $0x80] sm:$0xff]
    %v294 = vld [vmem:[%s4 + $0x88] sm:$0xff]
    %v295 = vld [vmem:[%s4 + $0x90] sm:$0xff]
    %v296 = vld [vmem:[%s4 + $0x98] sm:$0xff]
    %v297 = vld [vmem:[%s4 + $0xa0] sm:$0xff]
    %v298 = vld [vmem:[%s4 + $0xa8] sm:$0xff]
    %v299 = vld [vmem:[%s4 + $0xb0] sm:$0xff]
    %v300 = vld [vmem:[%s4 + $0xb8] sm:$0xff]
    %v301 = vld [vmem:[%s4 + $0xc0] sm:$0xff]
    %v302 = vld [vmem:[%s4 + $0xc8] sm:$0xff]
    %v303 = vld [vmem:[%s4 + $0xd0] sm:$0xff]
    %v304 = vld [vmem:[%s4 + $0xd8] sm:$0xff]
    %v305 = vld [vmem:[%s4 + $0xe0] sm:$0xff]
    %v306 = vld [vmem:[%s4 + $0xe8] sm:$0xff]
    %v307 = vld [vmem:[%s4 + $0xf0] sm:$0xff]
    %v308 = vld [vmem:[%s4 + $0xf8] sm:$0xff]
    %v309 = vld [vmem:[%s4 + $0x100] sm:$0xff]
    %v310 = vld [vmem:[%s4 + $0x108] sm:$0xff]
    %v311 = vld [vmem:[%s4 + $0x110] sm:$0xff]
    %v312 = vld [vmem:[%s4 + $0x118] sm:$0xff]
    %v313 = vld [vmem:[%s4 + $0x120] sm:$0xff]
    %v314 = vld [vmem:[%s4 + $0x128] sm:$0xff]
    %v315 = vld [vmem:[%s4 + $0x130] sm:$0xff]
    %v316 = vld [vmem:[%s4 + $0x138] sm:$0xff]
    %v317 = vld [vmem:[%s4 + $0x140] sm:$0xff]
    %v318 = vld [vmem:[%s4 + $0x148] sm:$0xff]
    %v319 = vld [vmem:[%s4 + $0x150] sm:$0xff]
    %v320 = vld [vmem:[%s4 + $0x158] sm:$0xff]
    %v321 = vld [vmem:[%s4 + $0x160] sm:$0xff]
    %v322 = vld [vmem:[%s4 + $0x168] sm:$0xff]
    %v323 = vld [vmem:[%s4 + $0x170] sm:$0xff]
    %v324 = vld [vmem:[%s4 + $0x178] sm:$0xff]
    %v325 = vld [vmem:[%s4 + $0x180] sm:$0xff]
    %v326 = vld [vmem:[%s4 + $0x188] sm:$0xff]
    %v327 = vld [vmem:[%s4 + $0x190] sm:$0xff]
    %v328 = vld [vmem:[%s4 + $0x198] sm:$0xff]
    %v329 = vld [vmem:[%s4 + $0x1a0] sm:$0xff]
    %v330 = vld [vmem:[%s4 + $0x1a8] sm:$0xff]
    %v331 = vld [vmem:[%s4 + $0x1b0] sm:$0xff]
    %v332 = vld [vmem:[%s4 + $0x1b8] sm:$0xff]
    %v333 = vld [vmem:[%s4 + $0x1c0] sm:$0xff]
    %v334 = vld [vmem:[%s4 + $0x1c8] sm:$0xff]
    %v335 = vld [vmem:[%s4 + $0x1d0] sm:$0xff]
    %v336 = vld [vmem:[%s4 + $0x1d8] sm:$0xff]
    %v337 = vld [vmem:[%s5] sm:$0x7]
    %v339 = vperm.slane %v337, 0
    %v340 = vperm.slane %v337, 1
    %v341 = vperm.slane %v337, 2
    %vm345 = vcmask 261120
    %v347 = vsel %vm345, %v276, 0
    %349 = vmatpush.msra.mxu0 %v322
    %350 = vmatpush.msra.mxu0 %v319
    %351 = vmatpush.msra.mxu0 %v316
    %352 = vmatpush.msra.mxu0 %v313
    %353 = vmatpush.msra.mxu0 %v310
    %354 = vmatpush.msra.mxu0 %v307
    %355 = vmatpush.msra.mxu0 %v304
    %356 = vmatpush.msra.mxu0 %v301
    %357 = vmatpush.msra.mxu0 %v298
    %358 = vmatpush.msra.mxu0 %v295
    %359 = vmatpush.msra.mxu0 %v292
    %360 = vmatpush.msra.mxu0 %v289
    %361 = vmatpush.msra.mxu0 %v286
    %362 = vmatpush.msra.mxu0 %v283
    %363 = vmatpush.msra.mxu0 %v280
    %364 = vmatpush.msra.mxu0 %v277
    %365 = vmatmul.f32.gmra.mxu0 %v275
    %v366 = vpop.f32.mrf.mxu0
    %v367 = vadd.f32 %v339, %v366
    %368 = vdwg.mxu0
    %369 = vmatpush.msra.mxu0 0.0
    %370 = vmatpush.msra.mxu0 0.0
    %371 = vmatpush.msra.mxu0 0.0
    %372 = vmatpush.msra.mxu0 0.0
    %373 = vmatpush.msra.mxu0 0.0
    %374 = vmatpush.msra.mxu0 0.0
    %375 = vmatpush.msra.mxu0 0.0
    %376 = vmatpush.msra.mxu0 0.0
    %377 = vmatpush.msra.mxu0 0.0
    %378 = vmatpush.msra.mxu0 0.0
    %379 = vmatpush.msra.mxu0 0.0
    %380 = vmatpush.msra.mxu0 0.0
    %381 = vmatpush.msra.mxu0 %v334
    %382 = vmatpush.msra.mxu0 %v331
    %383 = vmatpush.msra.mxu0 %v328
    %384 = vmatpush.msra.mxu0 %v325
    %385 = vmatmul.f32.gmra.mxu0 %v347
    %v386 = vpop.f32.mrf.mxu0
    %v387 = vadd.f32 %v367, %v386
    %388 = vdwg.mxu0
    %389 = vmatpush.msra.mxu0 %v323
    %390 = vmatpush.msra.mxu0 %v320
    %391 = vmatpush.msra.mxu0 %v317
    %392 = vmatpush.msra.mxu0 %v314
    %393 = vmatpush.msra.mxu0 %v311
    %394 = vmatpush.msra.mxu0 %v308
    %395 = vmatpush.msra.mxu0 %v305
    %396 = vmatpush.msra.mxu0 %v302
    %397 = vmatpush.msra.mxu0 %v299
    %398 = vmatpush.msra.mxu0 %v296
    %399 = vmatpush.msra.mxu0 %v293
    %400 = vmatpush.msra.mxu0 %v290
    %401 = vmatpush.msra.mxu0 %v287
    %402 = vmatpush.msra.mxu0 %v284
    %403 = vmatpush.msra.mxu0 %v281
    %404 = vmatpush.msra.mxu0 %v278
    %405 = vmatmul.f32.gmra.mxu0 %v275
    %v406 = vpop.f32.mrf.mxu0
    %v407 = vadd.f32 %v340, %v406
    %408 = vdwg.mxu0
    %409 = vmatpush.msra.mxu0 0.0
    %410 = vmatpush.msra.mxu0 0.0
    %411 = vmatpush.msra.mxu0 0.0
    %412 = vmatpush.msra.mxu0 0.0
    %413 = vmatpush.msra.mxu0 0.0
    %414 = vmatpush.msra.mxu0 0.0
    %415 = vmatpush.msra.mxu0 0.0
    %416 = vmatpush.msra.mxu0 0.0
    %417 = vmatpush.msra.mxu0 0.0
    %418 = vmatpush.msra.mxu0 0.0
    %419 = vmatpush.msra.mxu0 0.0
    %420 = vmatpush.msra.mxu0 0.0
    %421 = vmatpush.msra.mxu0 %v335
    %422 = vmatpush.msra.mxu0 %v332
    %423 = vmatpush.msra.mxu0 %v329
    %424 = vmatpush.msra.mxu0 %v326
    %425 = vmatmul.f32.gmra.mxu0 %v347
    %v426 = vpop.f32.mrf.mxu0
    %v427 = vadd.f32 %v407, %v426
    %428 = vdwg.mxu0
    %429 = vmatpush.msra.mxu0 %v324
    %430 = vmatpush.msra.mxu0 %v321
    %431 = vmatpush.msra.mxu0 %v318
    %432 = vmatpush.msra.mxu0 %v315
    %433 = vmatpush.msra.mxu0 %v312
    %434 = vmatpush.msra.mxu0 %v309
    %435 = vmatpush.msra.mxu0 %v306
    %436 = vmatpush.msra.mxu0 %v303
    %437 = vmatpush.msra.mxu0 %v300
    %438 = vmatpush.msra.mxu0 %v297
    %439 = vmatpush.msra.mxu0 %v294
    %440 = vmatpush.msra.mxu0 %v291
    %441 = vmatpush.msra.mxu0 %v288
    %442 = vmatpush.msra.mxu0 %v285
    %443 = vmatpush.msra.mxu0 %v282
    %444 = vmatpush.msra.mxu0 %v279
    %445 = vmatmul.f32.gmra.mxu0 %v275
    %v446 = vpop.f32.mrf.mxu0
    %v447 = vadd.f32 %v341, %v446
    %448 = vdwg.mxu0
    %449 = vmatpush.msra.mxu0 0.0
    %450 = vmatpush.msra.mxu0 0.0
    %451 = vmatpush.msra.mxu0 0.0
    %452 = vmatpush.msra.mxu0 0.0
    %453 = vmatpush.msra.mxu0 0.0
    %454 = vmatpush.msra.mxu0 0.0
    %455 = vmatpush.msra.mxu0 0.0
    %456 = vmatpush.msra.mxu0 0.0
    %457 = vmatpush.msra.mxu0 0.0
    %458 = vmatpush.msra.mxu0 0.0
    %459 = vmatpush.msra.mxu0 0.0
    %460 = vmatpush.msra.mxu0 0.0
    %461 = vmatpush.msra.mxu0 %v336
    %462 = vmatpush.msra.mxu0 %v333
    %463 = vmatpush.msra.mxu0 %v330
    %464 = vmatpush.msra.mxu0 %v327
    %465 = vmatmul.f32.gmra.mxu0 %v347
    %v466 = vpop.f32.mrf.mxu0
    %v467 = vadd.f32 %v447, %v466
    %468 = vdwg.mxu0
    %v469 = vadd.s32 %v136, 256
    %vm470 = vcmp.ge.s32.totalorder %v136, 160
    %vm471 = vcmp.ge.s32.totalorder %v137, 160
    %vm472 = vcmp.ge.s32.totalorder %v469, 160
    %vm473 = vcmp.lt.s32.totalorder %v136, 160
    %vm474 = vcmp.lt.s32.totalorder %v137, 160
    %vm475 = vcmp.lt.s32.totalorder %v469, 160
    %v476 = vsel %vm473, 1, 0
    %v477 = vsel %vm474, 1, 0
    %v478 = vsel %vm475, 1, 0
    %v479 = vcvt.s32.f32 %v476
    %v480 = vcvt.s32.f32 %v477
    %v481 = vcvt.s32.f32 %v478
    %v482 = vmul.f32 %v387, %v387
    %v483 = vmul.f32 %v427, %v427
    %v484 = vmul.f32 %v467, %v467
    %v485 = vsel %vm148, %v387, 0.0
    %v486 = vsel %vm148, %v427, 0.0
    %v487 = vadd.f32 %v485, %v486
    %vm488 = vcmask 517120
    %v489 = vsel %vm488, %v467, 0.0
    %v490 = vadd.f32 %v487, %v489
    %491 = vadd.xlane.f32.xlu0 %v490
    %v492 = vpop.xlane.xlu0 %491
    %v493 = vmul.f32 %v387, %v479
    %v494 = vmul.f32 %v427, %v480
    %v495 = vmul.f32 %v467, %v481
    %v496 = vsel %vm148, %v493, 0.0
    %v497 = vsel %vm148, %v494, 0.0
    %v498 = vadd.f32 %v496, %v497
    %v499 = vsel %vm488, %v495, 0.0
    %v500 = vadd.f32 %v498, %v499
    %501 = vadd.xlane.f32.xlu0 %v500
    %v502 = vpop.xlane.xlu0 %501
    %v503 = vsel %vm148, %v482, 0.0
    %v504 = vsel %vm148, %v483, 0.0
    %v505 = vadd.f32 %v503, %v504
    %v506 = vsel %vm488, %v484, 0.0
    %v507 = vadd.f32 %v505, %v506
    %508 = vadd.xlane.f32.xlu0 %v507
    %v509 = vpop.xlane.xlu0 %508
    %v510 = vmul.f32 %v482, %v479
    %v511 = vmul.f32 %v483, %v480
    %v512 = vmul.f32 %v484, %v481
    %v513 = vsel %vm148, %v510, 0.0
    %v514 = vsel %vm148, %v511, 0.0
    %v515 = vadd.f32 %v513, %v514
    %v516 = vsel %vm488, %v512, 0.0
    %v517 = vadd.f32 %v515, %v516
    %518 = vadd.xlane.f32.xlu0 %v517
    %v519 = vpop.xlane.xlu0 %518
    %v520 = vsel %vm174, %v502, 0.0
    %521 = vadd.xlane.f32.xlu0 %v520
    %v522 = vpop.xlane.xlu0 %521
    %v523 = vrot.slane %v522, 4
    %v524 = vadd.f32 %v522, %v523
    %v525 = vrot.slane %v524, 2
    %v526 = vadd.f32 %v524, %v525
    %v527 = vrot.slane %v526, 1
    %v528 = vadd.f32 %v526, %v527
    %s529 = vtos %v528
    %v530 = vsub.f32 %v492, %v502
    %v531 = vsel %vm174, %v530, 0.0
    %532 = vadd.xlane.f32.xlu0 %v531
    %v533 = vpop.xlane.xlu0 %532
    %v534 = vrot.slane %v533, 4
    %v535 = vadd.f32 %v533, %v534
    %v536 = vrot.slane %v535, 2
    %v537 = vadd.f32 %v535, %v536
    %v538 = vrot.slane %v537, 1
    %v539 = vadd.f32 %v537, %v538
    %s540 = vtos %v539
    %v541 = vsel %vm174, %v519, 0.0
    %542 = vadd.xlane.f32.xlu0 %v541
    %v543 = vpop.xlane.xlu0 %542
    %v544 = vrot.slane %v543, 4
    %v545 = vadd.f32 %v543, %v544
    %v546 = vrot.slane %v545, 2
    %v547 = vadd.f32 %v545, %v546
    %v548 = vrot.slane %v547, 1
    %v549 = vadd.f32 %v547, %v548
    %s550 = vtos %v549
    %v551 = vsub.f32 %v509, %v519
    %v552 = vsel %vm174, %v551, 0.0
    %553 = vadd.xlane.f32.xlu0 %v552
    %v554 = vpop.xlane.xlu0 %553
    %v555 = vrot.slane %v554, 4
    %v556 = vadd.f32 %v554, %v555
    %v557 = vrot.slane %v556, 2
    %v558 = vadd.f32 %v556, %v557
    %v559 = vrot.slane %v558, 1
    %v560 = vadd.f32 %v558, %v559
    %s561 = vtos %v560
    %s562 = smul.f32 %s529, 0.003125
    %s563 = smul.f32 %s540, 0.003125
    %s564 = smul.f32 %s550, 0.003125
    %s565 = smul.f32 %s562, %s562
    %s566 = ssub.f32 %s564, %s565
    %s567 = smax.f32 %s566, 0.0
    %s568 = smul.f32 %s561, 0.003125
    %s569 = smul.f32 %s563, %s563
    %s570 = ssub.f32 %s568, %s569
    %s571 = smax.f32 %s570, 0.0
    %s572 = sld [smem:[#allocation2 + $0x100]]
    %s573 = sld [smem:[#allocation2 + $0x101]]
    %s574 = sld [smem:[#allocation2 + $0x180]]
    %s575 = sld [smem:[#allocation2 + $0x181]]
    %s576 = sadd.f32 %s567, 1e-05
    %v577 = vstv %s576
    %v578 = vrsqrt.pop %v577
    %v579 = vmul.f32 %v578, %v577
    %v580 = vmul.f32 %v579, %v578
    %v581 = vmul.f32 0.5, %v580
    %v582 = vsub.f32 1.5, %v581
    %v583 = vmul.f32 %v578, %v582
    %vm584 = vweird.f32 %v577
    %vm585 = vweird.f32 %v578
    %vm586 = vmor %vm584, %vm585
    %v587 = vsel %vm586, %v578, %v583
    %s588 = vtos %v587
    %s589 = smul.f32 %s572, %s588
    %s590 = sadd.f32 %s571, 1e-05
    %v591 = vstv %s590
    %v592 = vrsqrt.pop %v591
    %v593 = vmul.f32 %v592, %v591
    %v594 = vmul.f32 %v593, %v592
    %v595 = vmul.f32 0.5, %v594
    %v596 = vsub.f32 1.5, %v595
    %v597 = vmul.f32 %v592, %v596
    %vm598 = vweird.f32 %v591
    %vm599 = vweird.f32 %v592
    %vm600 = vmor %vm598, %vm599
    %v601 = vsel %vm600, %v592, %v597
    %s602 = vtos %v601
    %s603 = smul.f32 %s573, %s602
    %s604 = smul.f32 %s562, %s589
    %s605 = ssub.f32 %s574, %s604
    %s606 = smul.f32 %s563, %s603
    %s607 = ssub.f32 %s575, %s606
    %v608 = vstv %s603
    %v609 = vstv %s589
    %v610 = vsel %vm470, %v608, %v609
    %v611 = vsel %vm471, %v608, %v609
    %v612 = vsel %vm472, %v608, %v609
    %v613 = vstv %s607
    %v614 = vstv %s605
    %v615 = vsel %vm470, %v613, %v614
    %v616 = vsel %vm471, %v613, %v614
    %v617 = vsel %vm472, %v613, %v614
    %v618 = vmul.f32 %v387, %v610
    %v619 = vmul.f32 %v427, %v611
    %v620 = vmul.f32 %v467, %v612
    %v621 = vadd.f32 %v618, %v615
    %v622 = vadd.f32 %v619, %v616
    %v623 = vadd.f32 %v620, %v617
    %v624 = vmax.f32 %v621, 0.0
    %v625 = vmax.f32 %v622, 0.0
    %v626 = vmax.f32 %v623, 0.0
    %v627 = vld [vmem:[%s6] sm:$0xff]
    %v628 = vld [vmem:[%s6 + $0x8] sm:$0xff]
    %v629 = vld [vmem:[%s6 + $0x10] sm:$0xff]
    %v630 = vld [vmem:[%s6 + $0x18] sm:$0xff]
    %v631 = vld [vmem:[%s6 + $0x20] sm:$0xff]
    %v632 = vld [vmem:[%s6 + $0x28] sm:$0xff]
    %v633 = vld [vmem:[%s6 + $0x30] sm:$0xff]
    %v634 = vld [vmem:[%s6 + $0x38] sm:$0xff]
    %v635 = vld [vmem:[%s6 + $0x40] sm:$0xff]
    %v636 = vld [vmem:[%s6 + $0x48] sm:$0xff]
    %v637 = vld [vmem:[%s6 + $0x50] sm:$0xff]
    %v638 = vld [vmem:[%s6 + $0x58] sm:$0xff]
    %v639 = vld [vmem:[%s6 + $0x60] sm:$0xff]
    %v640 = vld [vmem:[%s6 + $0x68] sm:$0xff]
    %v641 = vld [vmem:[%s6 + $0x70] sm:$0xff]
    %v642 = vld [vmem:[%s6 + $0x78] sm:$0xff]
    %v643 = vld [vmem:[%s6 + $0x80] sm:$0xff]
    %v644 = vld [vmem:[%s6 + $0x88] sm:$0xff]
    %v645 = vld [vmem:[%s6 + $0x90] sm:$0xff]
    %v646 = vld [vmem:[%s6 + $0x98] sm:$0xff]
    %v647 = vld [vmem:[%s6 + $0xa0] sm:$0xff]
    %v648 = vld [vmem:[%s6 + $0xa8] sm:$0xff]
    %v649 = vld [vmem:[%s6 + $0xb0] sm:$0xff]
    %v650 = vld [vmem:[%s6 + $0xb8] sm:$0xff]
    %v651 = vld [vmem:[%s6 + $0xc0] sm:$0xff]
    %v652 = vld [vmem:[%s6 + $0xc8] sm:$0xff]
    %v653 = vld [vmem:[%s6 + $0xd0] sm:$0xff]
    %v654 = vld [vmem:[%s6 + $0xd8] sm:$0xff]
    %v655 = vld [vmem:[%s6 + $0xe0] sm:$0xff]
    %v656 = vld [vmem:[%s6 + $0xe8] sm:$0xff]
    %v657 = vld [vmem:[%s6 + $0xf0] sm:$0xff]
    %v658 = vld [vmem:[%s6 + $0xf8] sm:$0xff]
    %v659 = vld [vmem:[%s6 + $0x100] sm:$0xff]
    %v660 = vld [vmem:[%s6 + $0x108] sm:$0xff]
    %v661 = vld [vmem:[%s6 + $0x110] sm:$0xff]
    %v662 = vld [vmem:[%s6 + $0x118] sm:$0xff]
    %v663 = vld [vmem:[%s6 + $0x120] sm:$0xff]
    %v664 = vld [vmem:[%s6 + $0x128] sm:$0xff]
    %v665 = vld [vmem:[%s6 + $0x130] sm:$0xff]
    %v666 = vld [vmem:[%s6 + $0x138] sm:$0xff]
    %v667 = vld [vmem:[%s7] sm:$0x1]
    %v669 = vperm.slane %v667, 0
    %vm671 = vcmask 523264
    %v673 = vsel %vm671, %v626, 0
    %675 = vmatpush.msra.mxu0 %v642
    %676 = vmatpush.msra.mxu0 %v641
    %677 = vmatpush.msra.mxu0 %v640
    %678 = vmatpush.msra.mxu0 %v639
    %679 = vmatpush.msra.mxu0 %v638
    %680 = vmatpush.msra.mxu0 %v637
    %681 = vmatpush.msra.mxu0 %v636
    %682 = vmatpush.msra.mxu0 %v635
    %683 = vmatpush.msra.mxu0 %v634
    %684 = vmatpush.msra.mxu0 %v633
    %685 = vmatpush.msra.mxu0 %v632
    %686 = vmatpush.msra.mxu0 %v631
    %687 = vmatpush.msra.mxu0 %v630
    %688 = vmatpush.msra.mxu0 %v629
    %689 = vmatpush.msra.mxu0 %v628
    %690 = vmatpush.msra.mxu0 %v627
    %691 = vmatmul.f32.gmra.mxu0 %v624
    %v692 = vpop.f32.mrf.mxu0
    %v693 = vadd.f32 %v669, %v692
    %694 = vdwg.mxu0
    %695 = vmatpush.msra.mxu0 %v658
    %696 = vmatpush.msra.mxu0 %v657
    %697 = vmatpush.msra.mxu0 %v656
    %698 = vmatpush.msra.mxu0 %v655
    %699 = vmatpush.msra.mxu0 %v654
    %700 = vmatpush.msra.mxu0 %v653
    %701 = vmatpush.msra.mxu0 %v652
    %702 = vmatpush.msra.mxu0 %v651
    %703 = vmatpush.msra.mxu0 %v650
    %704 = vmatpush.msra.mxu0 %v649
    %705 = vmatpush.msra.mxu0 %v648
    %706 = vmatpush.msra.mxu0 %v647
    %707 = vmatpush.msra.mxu0 %v646
    %708 = vmatpush.msra.mxu0 %v645
    %709 = vmatpush.msra.mxu0 %v644
    %710 = vmatpush.msra.mxu0 %v643
    %711 = vmatmul.f32.gmra.mxu0 %v625
    %v712 = vpop.f32.mrf.mxu0
    %v713 = vadd.f32 %v693, %v712
    %714 = vdwg.mxu0
    %715 = vmatpush.msra.mxu0 0.0
    %716 = vmatpush.msra.mxu0 0.0
    %717 = vmatpush.msra.mxu0 0.0
    %718 = vmatpush.msra.mxu0 0.0
    %719 = vmatpush.msra.mxu0 0.0
    %720 = vmatpush.msra.mxu0 0.0
    %721 = vmatpush.msra.mxu0 0.0
    %722 = vmatpush.msra.mxu0 0.0
    %723 = vmatpush.msra.mxu0 %v666
    %724 = vmatpush.msra.mxu0 %v665
    %725 = vmatpush.msra.mxu0 %v664
    %726 = vmatpush.msra.mxu0 %v663
    %727 = vmatpush.msra.mxu0 %v662
    %728 = vmatpush.msra.mxu0 %v661
    %729 = vmatpush.msra.mxu0 %v660
    %730 = vmatpush.msra.mxu0 %v659
    %731 = vmatmul.f32.gmra.mxu0 %v673
    %v732 = vpop.f32.mrf.mxu0
    %v733 = vadd.f32 %v713, %v732
    %734 = vdwg.mxu0
    %vm735 = vcmp.ge.s32.totalorder %v136, 42
    %vm736 = vcmp.lt.s32.totalorder %v136, 42
    %v737 = vsel %vm736, 1, 0
    %v738 = vcvt.s32.f32 %v737
    %v739 = vmul.f32 %v733, %v733
    %vm740 = vcmask 680960
    %v741 = vsel %vm740, %v733, 0.0
    %742 = vadd.xlane.f32.xlu0 %v741
    %v743 = vpop.xlane.xlu0 %742
    %v744 = vmul.f32 %v733, %v738
    %v745 = vsel %vm740, %v744, 0.0
    %746 = vadd.xlane.f32.xlu0 %v745
    %v747 = vpop.xlane.xlu0 %746
    %v748 = vsel %vm740, %v739, 0.0
    %749 = vadd.xlane.f32.xlu0 %v748
    %v750 = vpop.xlane.xlu0 %749
    %v751 = vmul.f32 %v739, %v738
    %v752 = vsel %vm740, %v751, 0.0
    %753 = vadd.xlane.f32.xlu0 %v752
    %v754 = vpop.xlane.xlu0 %753
    %v755 = vsel %vm174, %v747, 0.0
    %756 = vadd.xlane.f32.xlu0 %v755
    %v757 = vpop.xlane.xlu0 %756
    %v758 = vrot.slane %v757, 4
    %v759 = vadd.f32 %v757, %v758
    %v760 = vrot.slane %v759, 2
    %v761 = vadd.f32 %v759, %v760
    %v762 = vrot.slane %v761, 1
    %v763 = vadd.f32 %v761, %v762
    %s764 = vtos %v763
    %v765 = vsub.f32 %v743, %v747
    %v766 = vsel %vm174, %v765, 0.0
    %767 = vadd.xlane.f32.xlu0 %v766
    %v768 = vpop.xlane.xlu0 %767
    %v769 = vrot.slane %v768, 4
    %v770 = vadd.f32 %v768, %v769
    %v771 = vrot.slane %v770, 2
    %v772 = vadd.f32 %v770, %v771
    %v773 = vrot.slane %v772, 1
    %v774 = vadd.f32 %v772, %v773
    %s775 = vtos %v774
    %v776 = vsel %vm174, %v754, 0.0
    %777 = vadd.xlane.f32.xlu0 %v776
    %v778 = vpop.xlane.xlu0 %777
    %v779 = vrot.slane %v778, 4
    %v780 = vadd.f32 %v778, %v779
    %v781 = vrot.slane %v780, 2
    %v782 = vadd.f32 %v780, %v781
    %v783 = vrot.slane %v782, 1
    %v784 = vadd.f32 %v782, %v783
    %s785 = vtos %v784
    %v786 = vsub.f32 %v750, %v754
    %v787 = vsel %vm174, %v786, 0.0
    %788 = vadd.xlane.f32.xlu0 %v787
    %v789 = vpop.xlane.xlu0 %788
    %v790 = vrot.slane %v789, 4
    %v791 = vadd.f32 %v789, %v790
    %v792 = vrot.slane %v791, 2
    %v793 = vadd.f32 %v791, %v792
    %v794 = vrot.slane %v793, 1
    %v795 = vadd.f32 %v793, %v794
    %s796 = vtos %v795
    %s797 = smul.f32 %s764, 0.011904762
    %s798 = smul.f32 %s775, 0.011904762
    %s799 = smul.f32 %s785, 0.011904762
    %s800 = smul.f32 %s797, %s797
    %s801 = ssub.f32 %s799, %s800
    %s802 = smax.f32 %s801, 0.0
    %s803 = smul.f32 %s796, 0.011904762
    %s804 = smul.f32 %s798, %s798
    %s805 = ssub.f32 %s803, %s804
    %s806 = smax.f32 %s805, 0.0
    %s807 = sld [smem:[#allocation2 + $0x200]]
    %s808 = sld [smem:[#allocation2 + $0x201]]
    %s809 = sld [smem:[#allocation2 + $0x280]]
    %s810 = sld [smem:[#allocation2 + $0x281]]
    %s811 = sadd.f32 %s802, 1e-05
    %v812 = vstv %s811
    %v813 = vrsqrt.pop %v812
    %v814 = vmul.f32 %v813, %v812
    %v815 = vmul.f32 %v814, %v813
    %v816 = vmul.f32 0.5, %v815
    %v817 = vsub.f32 1.5, %v816
    %v818 = vmul.f32 %v813, %v817
    %vm819 = vweird.f32 %v812
    %vm820 = vweird.f32 %v813
    %vm821 = vmor %vm819, %vm820
    %v822 = vsel %vm821, %v813, %v818
    %s823 = vtos %v822
    %s824 = smul.f32 %s807, %s823
    %s825 = sadd.f32 %s806, 1e-05
    %v826 = vstv %s825
    %v827 = vrsqrt.pop %v826
    %v828 = vmul.f32 %v827, %v826
    %v829 = vmul.f32 %v828, %v827
    %v830 = vmul.f32 0.5, %v829
    %v831 = vsub.f32 1.5, %v830
    %v832 = vmul.f32 %v827, %v831
    %vm833 = vweird.f32 %v826
    %vm834 = vweird.f32 %v827
    %vm835 = vmor %vm833, %vm834
    %v836 = vsel %vm835, %v827, %v832
    %s837 = vtos %v836
    %s838 = smul.f32 %s808, %s837
    %s839 = smul.f32 %s797, %s824
    %s840 = ssub.f32 %s809, %s839
    %s841 = smul.f32 %s798, %s838
    %s842 = ssub.f32 %s810, %s841
    %v843 = vstv %s838
    %v844 = vstv %s824
    %v845 = vsel %vm735, %v843, %v844
    %v846 = vstv %s842
    %v847 = vstv %s840
    %v848 = vsel %vm735, %v846, %v847
    %v849 = vmul.f32 %v733, %v845
    %v850 = vadd.f32 %v849, %v848
    %v851 = vld [vmem:[%s8] sm:$0xff]
    %v852 = vld [vmem:[%s8 + $0x8] sm:$0xff]
    %v853 = vld [vmem:[%s8 + $0x10] sm:$0xff]
    %v854 = vld [vmem:[%s8 + $0x18] sm:$0xff]
    %v855 = vld [vmem:[%s8 + $0x20] sm:$0xff]
    %v856 = vld [vmem:[%s8 + $0x28] sm:$0xff]
    %v857 = vld [vmem:[%s8 + $0x30] sm:$0xff]
    %v858 = vld [vmem:[%s8 + $0x38] sm:$0xff]
    %v859 = vld [vmem:[%s8 + $0x40] sm:$0xff]
    %v860 = vld [vmem:[%s8 + $0x48] sm:$0xff]
    %v861 = vld [vmem:[%s8 + $0x50] sm:$0xf]
    %v862 = vld [vmem:[%s9] sm:$0x1]
    %v864 = vperm.slane %v862, 0
    %v867 = vsel %vm84, %v850, 0
    %v870 = vsel %vm88, %v861, 0
    %872 = vmatpush.msra.mxu0 0.0
    %873 = vmatpush.msra.mxu0 0.0
    %874 = vmatpush.msra.mxu0 0.0
    %875 = vmatpush.msra.mxu0 0.0
    %876 = vmatpush.msra.mxu0 0.0
    %877 = vmatpush.msra.mxu0 %v870
    %878 = vmatpush.msra.mxu0 %v860
    %879 = vmatpush.msra.mxu0 %v859
    %880 = vmatpush.msra.mxu0 %v858
    %881 = vmatpush.msra.mxu0 %v857
    %882 = vmatpush.msra.mxu0 %v856
    %883 = vmatpush.msra.mxu0 %v855
    %884 = vmatpush.msra.mxu0 %v854
    %885 = vmatpush.msra.mxu0 %v853
    %886 = vmatpush.msra.mxu0 %v852
    %887 = vmatpush.msra.mxu0 %v851
    %888 = vmatmul.f32.gmra.mxu0 %v867
    %v889 = vpop.f32.mrf.mxu0
    %v890 = vadd.f32 %v864, %v889
    %891 = vdwg.mxu0
    %v892 = vmax.f32 %v890, 0.0
    %v893 = vld [vmem:[%s10] sm:$0xff]
    %v894 = vld [vmem:[%s10 + $0x8] sm:$0x3f]
    %v895 = vld [vmem:[%s11] sm:$0x1]
    %v897 = vperm.slane %v895, 0
    %vm899 = vcmask 113664
    %v901 = vsel %vm899, %v892, 0
    %vm903 = vcmask 1045504
    %v905 = vsel %vm903, %v894, 0
    %907 = vmatpush.msra.mxu0 0.0
    %908 = vmatpush.msra.mxu0 0.0
    %909 = vmatpush.msra.mxu0 0.0
    %910 = vmatpush.msra.mxu0 0.0
    %911 = vmatpush.msra.mxu0 0.0
    %912 = vmatpush.msra.mxu0 0.0
    %913 = vmatpush.msra.mxu0 0.0
    %914 = vmatpush.msra.mxu0 0.0
    %915 = vmatpush.msra.mxu0 0.0
    %916 = vmatpush.msra.mxu0 0.0
    %917 = vmatpush.msra.mxu0 0.0
    %918 = vmatpush.msra.mxu0 0.0
    %919 = vmatpush.msra.mxu0 0.0
    %920 = vmatpush.msra.mxu0 0.0
    %921 = vmatpush.msra.mxu0 %v905
    %922 = vmatpush.msra.mxu0 %v893
    %923 = vmatmul.f32.gmra.mxu0 %v901
    %v924 = vpop.f32.mrf.mxu0
    %v925 = vadd.f32 %v897, %v924
    %926 = vdwg.mxu0
    %vm927 = vcmask 50176
    %v928 = vsel %vm927, %v925, -inf
    %929 = vmax.xlane.f32.xlu0 %v928
    %v930 = vpop.xlane.xlu0 %929
    %v931 = vsub.f32 %v925, %v930
    %v932 = vmul.f32 %v931, 1.442695
    %v933 = vpow.pop %v932
    %v934 = vsel %vm927, %v933, 0.0
    %935 = vadd.xlane.f32.xlu0 %v934
    %v936 = vpop.xlane.xlu0 %935
    %v937 = vrcp.pop %v936
    %v938 = vmul.f32 %v936, %v937
    %v939 = vsub.f32 1.0, %v938
    %v940 = vmul.f32 %v937, %v939
    %v941 = vadd.f32 %v937, %v940
    %vm942 = vweird.f32 %v936
    %vm943 = vweird.f32 %v937
    %vm944 = vmor %vm942, %vm943
    %v945 = vsel %vm944, %v937, %v941
    %v946 = vand.u32 2147483647, %v936
    %vm947 = vcmp.eq.f32.partialorder %v946, 8.507059e+37
    %v948 = vand.u32 %v936, 2147483648
    %v949 = vor.u32 1.1754944e-38, %v948
    %v950 = vsel %vm947, %v949, %v945
    %v951 = vmul.f32 %v933, %v950
    %952 = vst.msk [vmem:[#allocation5] sm:$0x3] %vm927, %v951
    // Predicated region
    $region54: #{tpu_custom_call.1} parent=1 // pred_check
      _
    $region55: #{tpu_custom_call.1} parent=1 // pred_check_branch
      %954 = sbr.rel (0) target = $region57
    $region56: #{tpu_custom_call.1} parent=1 // pred_region
      %956 = vsyncadd [#allocation3], 0
      %s958 = sshll.u32 [#allocation5], 4
      %s959 = int_to_ptr.vmem [resolvable:$true] %s958
      %s960 = sshll.u32 %s12, 4
      %s961 = int_to_ptr.hbm [resolvable:$true] %s960
      %963 = dma.vmem_to_hbm [thread:$0]  %s959, 32, %s961, [#allocation3]
    $region57: #{tpu_custom_call.1} parent=1 // pred_fallthru
      _
    // Predicated region
    $region58: #{tpu_custom_call.1} parent=1 // pred_check
      _
    $region59: #{tpu_custom_call.1} parent=1 // pred_check_branch
      %965 = sbr.rel (0) target = $region61
    $region60: #{tpu_custom_call.1} parent=1 // pred_region
      %967 = dma.done [#allocation3], 32
    $region61: #{tpu_custom_call.1} parent=1 // pred_fallthru
      _
    %968 = vsyncpa [#allocation3], 1
    %969 = vsyncpa [#allocation4], 1

</llo_original>
